<compile_context>
chip_gen: v7x
topology: tpu7x:2x2x1
jax: 0.10.0
libtpu: 0.0.40
codegen_flags: <defaults>
</compile_context>

<pallas_src>
import numpy as np
import jax
import jax.numpy as jnp
from jax.experimental import pallas as pl
from jax.experimental.pallas import tpu as pltpu


def _round_up(x, m):
    return ((x + m - 1) // m) * m


# ----------------------------- Pallas kernel ------------------------------ #
def tower_kernel(x_ref, w1_ref, b1_ref, w2t_ref, o_ref):
    # First linear on the MXU, bias + tanh on VPU/EUP.
    h = jnp.dot(x_ref[...], w1_ref[...], preferred_element_type=jnp.float32)
    h = jnp.tanh(h + b1_ref[...])                         # (tm, H)
    # Second linear has a single output column -> VPU multiply + XLU lane
    # reduce instead of a padded 1-column MXU matmul.
    f = jnp.sum(h * w2t_ref[...], axis=-1)                # (tm,)
    # Lane-dense store: tm contiguous lanes, no masked partial stores.
    o_ref[...] = f[None, None, :]                         # (1, 1, tm)


def tower_forward(x, w1, b1, w2, *, tm=512):
    """Discriminator tower: tanh(x @ w1 + b1) @ w2, tiled over rows.

    Returns an (N, 1) float32 array exactly matching the torch Sequential.
    """
    N, D = x.shape
    H = w1.shape[1]

    # Row tile: multiple of 8 (sublane), no larger than the padded row count.
    tm = min(tm, _round_up(N, 8))
    tm = _round_up(tm, 8)
    N_pad = _round_up(N, tm)
    num_tiles = N_pad // tm
    if N_pad != N:
        x = jnp.pad(x, ((0, N_pad - N), (0, 0)))          # padded rows discarded

    w2t = w2.reshape(1, H)                                # (H, 1) -> (1, H)

    out = pl.pallas_call(
        tower_kernel,
        out_shape=jax.ShapeDtypeStruct((num_tiles, 1, tm), jnp.float32),
        grid=(num_tiles,),
        in_specs=[
            # Only x is tiled over rows; the weights use constant index_maps so
            # they are fetched once and stay resident in VMEM across the grid.
            pl.BlockSpec((tm, D), lambda i: (i, 0)),
            pl.BlockSpec((D, H), lambda i: (0, 0)),
            pl.BlockSpec((1, H), lambda i: (0, 0)),
            pl.BlockSpec((1, H), lambda i: (0, 0)),
        ],
        # Lane-dense output block; block's last two dims equal the array's.
        out_specs=pl.BlockSpec((1, 1, tm), lambda i: (i, 0, 0)),
        compiler_params=pltpu.CompilerParams(
            dimension_semantics=("parallel",)),           # row tiles are independent
    )(x, w1, b1, w2t)

    # Restore torch's (N, 1) column layout (cheap host-side/XLA reshape).
    return out.reshape(-1)[:N].reshape(N, 1)


# ------------------------ parameter / input setup -------------------------- #
def build_inputs(n_states, n_actions, ob_dim, ac_dim):
    """Replicates __init__'s input construction:
       concat(env.get_features(state), one_hot(action)) for every (s, a)."""
    state_feats = np.eye(n_states, ob_dim, dtype=np.float32)   # synthetic env features
    action_one_hot = np.eye(ac_dim, dtype=np.float32)
    rows = []
    for n in range(n_states):
        for a in range(n_actions):
            rows.append(np.concatenate((state_feats[n], action_one_hot[a])))
    return jnp.asarray(np.array(rows, dtype=np.float32))


def init_params(key, input_dim, hidden_dim):
    """Deterministic init mimicking nn.Linear defaults (uniform +-1/sqrt(fan_in))."""
    k1, k2, k3 = jax.random.split(key, 3)
    bound1 = 1.0 / np.sqrt(input_dim)
    bound2 = 1.0 / np.sqrt(hidden_dim)
    w1 = jax.random.uniform(k1, (input_dim, hidden_dim), jnp.float32, -bound1, bound1)
    b1 = jax.random.uniform(k2, (1, hidden_dim), jnp.float32, -bound1, bound1)
    w2 = jax.random.uniform(k3, (hidden_dim, 1), jnp.float32, -bound2, bound2)
    logZ = jnp.ones((1,), jnp.float32)   # nn.Parameter(torch.ones(1)); not used by tower
    return w1, b1, w2, logZ


# --------------------------------- main ------------------------------------ #
if __name__ == "__main__":
    # Shapes consistent with the module: env with 8 states / 4 actions,
    # ob_dim = 8 (one-hot state features), ac_dim = 4, hidden_dim = 32.
    n_states, n_actions = 8, 4
    ob_dim, ac_dim, hidden_dim = 8, 4, 32
    input_dim = ob_dim + ac_dim                  # 12
    N = n_states * n_actions                     # 32

    key = jax.random.PRNGKey(0)
    w1, b1, w2, logZ = init_params(key, input_dim, hidden_dim)
    x = build_inputs(n_states, n_actions, ob_dim, ac_dim)     # (32, 12)

    f = jax.block_until_ready(tower_forward(x, w1, b1, w2))
    f_ref = jnp.tanh(x @ w1 + b1) @ w2
    np.testing.assert_allclose(np.asarray(f), np.asarray(f_ref),
                               rtol=1e-5, atol=1e-5)

    # Batched check exercising the multi-tile grid path: this is how the
    # kernel should be driven in update()/predict_batch_rewards() to amortize
    # the per-call fixed cost (many rows per pallas_call, weights shipped once).
    xb = jax.random.normal(jax.random.PRNGKey(1), (1024, input_dim), jnp.float32)
    fb = jax.block_until_ready(tower_forward(xb, w1, b1, w2, tm=256))
    fb_ref = jnp.tanh(xb @ w1 + b1) @ w2
    np.testing.assert_allclose(np.asarray(fb), np.asarray(fb_ref),
                               rtol=1e-5, atol=1e-5)

    # TODO(synk): forward() raises NotImplementedError in the torch module, and
    # update() is an Adam/autograd training step — only the tower forward (the
    # kernel-worthy compute) is implemented here.

    print("KERNEL_OK")
</pallas_src>

<mosaic_0001>
module attributes {stable_mosaic.version = 11 : i64} {
  func.func @tower_kernel(%arg0: i32, %arg1: memref<32x12xf32, #tpu.memory_space<vmem>>, %arg2: memref<12x32xf32, #tpu.memory_space<vmem>>, %arg3: memref<1x32xf32, #tpu.memory_space<vmem>>, %arg4: memref<1x32xf32, #tpu.memory_space<vmem>>, %arg5: memref<1x1x32xf32, #tpu.memory_space<vmem>>) attributes {dimension_semantics = [#tpu.dimension_semantics<parallel>], iteration_bounds = array<i64: 1>, scalar_prefetch = 0 : i64, scratch_operands = 0 : i64, tpu.core_type = #tpu.core_type<tc>, window_params = [{transform_indices = @transform_0, window_bounds = array<i64: 32, 12>}, {pipeline_mode = #tpu.pipeline_mode<synchronous>, transform_indices = @transform_1, window_bounds = array<i64: 12, 32>}, {pipeline_mode = #tpu.pipeline_mode<synchronous>, transform_indices = @transform_2, window_bounds = array<i64: 1, 32>}, {pipeline_mode = #tpu.pipeline_mode<synchronous>, transform_indices = @transform_3, window_bounds = array<i64: 1, 32>}, {transform_indices = @transform_4, window_bounds = array<i64: 1, 1, 32>}]} {
    %c0 = arith.constant 0 : index
    %c0_0 = arith.constant 0 : index
    %0 = vector.load %arg1[%c0, %c0_0] : memref<32x12xf32, #tpu.memory_space<vmem>>, vector<32x12xf32>
    %c0_1 = arith.constant 0 : index
    %c0_2 = arith.constant 0 : index
    %1 = vector.load %arg2[%c0_1, %c0_2] : memref<12x32xf32, #tpu.memory_space<vmem>>, vector<12x32xf32>
    %cst = arith.constant dense<0.000000e+00> : vector<32x32xf32>
    %2 = tpu.matmul %0, %1, %cst {dimension_numbers = #tpu.dot_dimension_numbers<[1], [0], [0], [1], [0, 0, 1, 1], [], []>} : vector<32x12xf32>, vector<12x32xf32>, vector<32x32xf32> -> vector<32x32xf32>
    %c0_3 = arith.constant 0 : index
    %c0_4 = arith.constant 0 : index
    %3 = vector.load %arg3[%c0_3, %c0_4] : memref<1x32xf32, #tpu.memory_space<vmem>>, vector<1x32xf32>
    %4 = vector.broadcast %3 : vector<1x32xf32> to vector<32x32xf32>
    %5 = arith.addf %2, %4 : vector<32x32xf32>
    %6 = math.tanh %5 : vector<32x32xf32>
    %c0_5 = arith.constant 0 : index
    %c0_6 = arith.constant 0 : index
    %7 = vector.load %arg4[%c0_5, %c0_6] : memref<1x32xf32, #tpu.memory_space<vmem>>, vector<1x32xf32>
    %8 = vector.broadcast %7 : vector<1x32xf32> to vector<32x32xf32>
    %9 = arith.mulf %6, %8 : vector<32x32xf32>
    %cst_7 = arith.constant dense<0.000000e+00> : vector<32xf32>
    %10 = vector.multi_reduction <add>, %9, %cst_7 [1] : vector<32x32xf32> to vector<32xf32>
    %11 = vector.shape_cast %10 : vector<32xf32> to vector<1x1x32xf32>
    %c0_8 = arith.constant 0 : index
    %c0_9 = arith.constant 0 : index
    %c0_10 = arith.constant 0 : index
    %12 = vector.load %arg5[%c0_8, %c0_9, %c0_10] : memref<1x1x32xf32, #tpu.memory_space<vmem>>, vector<1x1x32xf32>
    tpu.vector_store %arg5[%c0_8, %c0_9, %c0_10], %11 {strides = array<i32>} : memref<1x1x32xf32, #tpu.memory_space<vmem>>, vector<1x1x32xf32>,
    return
  }
  func.func @transform_0(%arg0: i32) -> (i32, i32) {
    %c0_i32 = arith.constant 0 : i32
    %c0_i32_0 = arith.constant 0 : i32
    return %arg0, %c0_i32 : i32, i32
  }
  func.func @transform_1(%arg0: i32) -> (i32, i32) {
    %c0_i32 = arith.constant 0 : i32
    %c0_i32_0 = arith.constant 0 : i32
    %c0_i32_1 = arith.constant 0 : i32
    return %c0_i32, %c0_i32_0 : i32, i32
  }
  func.func @transform_2(%arg0: i32) -> (i32, i32) {
    %c0_i32 = arith.constant 0 : i32
    %c0_i32_0 = arith.constant 0 : i32
    %c0_i32_1 = arith.constant 0 : i32
    return %c0_i32, %c0_i32_0 : i32, i32
  }
  func.func @transform_3(%arg0: i32) -> (i32, i32) {
    %c0_i32 = arith.constant 0 : i32
    %c0_i32_0 = arith.constant 0 : i32
    %c0_i32_1 = arith.constant 0 : i32
    return %c0_i32, %c0_i32_0 : i32, i32
  }
  func.func @transform_4(%arg0: i32) -> (i32, i32, i32) {
    %c0_i32 = arith.constant 0 : i32
    %c0_i32_0 = arith.constant 0 : i32
    %c0_i32_1 = arith.constant 0 : i32
    return %arg0, %c0_i32, %c0_i32_0 : i32, i32, i32
  }
}

</mosaic_0001>

<llo_original>
// kernel: tpu_custom_call.1
$region0: #{tpu_custom_call.1}
  #allocation0 [shape = 'u32[]', space=smem, size = 0x4, offset = 0x4, fixed_abs, tag = 'smem constant byte address 0x4 - core index']
  #allocation1 [shape = 'u32[144,128]{1,0:T(1,128)}', space=vmem, size = 0x12000, scoped, tag = 'internal scratch']
  %s0 = inlined_call_operand.vmem [shape: f32[32,12], index: 0, kind: input, shape index: {}]
  %s1 = inlined_call_operand.vmem [shape: f32[12,32], index: 1, kind: input, shape index: {}]
  %s2 = inlined_call_operand.vmem [shape: f32[1,32], index: 2, kind: input, shape index: {}]
  %s3 = inlined_call_operand.vmem [shape: f32[1,32], index: 3, kind: input, shape index: {}]
  %s4 = inlined_call_operand.hbm [shape: f32[1,1,32], index: 4, kind: output, shape index: {}]
  %s5 = sld [smem:[#allocation0]]
  $region26: #{tpu_custom_call.1} parent=0
    _
  %s7 = ssub.s32 1, %s5
  %s8 = scalar_select 0, %s7, %s5
  $region1: #{tpu_custom_call.1} parent=0
    #allocation2 [shape = 'u8[512]{0}', space=vmem, size = 0x400, scoped, tag = 'output window, operand 0, single buffered']
    #allocation3 [shape = 's32[1]{0}', space=sflag, size = 0x4, scoped, tag = 'scoped memory for tpu_custom_call.1']
    %9 = vsyncpa [#allocation3], 0
    // Predicated region
    $region2: #{tpu_custom_call.1} parent=1 // pred_check
      _
    $region3: #{tpu_custom_call.1} parent=1 // pred_check_branch
      %11 = sbr.rel (0) target = $region5
    $region4: #{tpu_custom_call.1} parent=1 // pred_region
      _
    $region5: #{tpu_custom_call.1} parent=1 // pred_fallthru
      _
    // Predicated region
    $region6: #{tpu_custom_call.1} parent=1 // pred_check
      _
    $region7: #{tpu_custom_call.1} parent=1 // pred_check_branch
      %13 = sbr.rel (0) target = $region9
    $region8: #{tpu_custom_call.1} parent=1 // pred_region
      _
    $region9: #{tpu_custom_call.1} parent=1 // pred_fallthru
      _
    // Predicated region
    $region10: #{tpu_custom_call.1} parent=1 // pred_check
      _
    $region11: #{tpu_custom_call.1} parent=1 // pred_check_branch
      %15 = sbr.rel (0) target = $region13
    $region12: #{tpu_custom_call.1} parent=1 // pred_region
      _
    $region13: #{tpu_custom_call.1} parent=1 // pred_fallthru
      _
    // Predicated region
    $region14: #{tpu_custom_call.1} parent=1 // pred_check
      _
    $region15: #{tpu_custom_call.1} parent=1 // pred_check_branch
      %17 = sbr.rel (0) target = $region17
    $region16: #{tpu_custom_call.1} parent=1 // pred_region
      _
    $region17: #{tpu_custom_call.1} parent=1 // pred_fallthru
      _
    %v18 = vld [vmem:[%s0] sm:$0xff]
    %v19 = vld [vmem:[%s0 + $0x8] sm:$0xff]
    %v20 = vld [vmem:[%s0 + $0x10] sm:$0xff]
    %v21 = vld [vmem:[%s0 + $0x18] sm:$0xff]
    %v22 = vld [vmem:[%s1] sm:$0xff]
    %v23 = vld [vmem:[%s1 + $0x8] sm:$0xf]
    %v24 = vld [vmem:[%s2] sm:$0x1]
    %v26 = vlaneseq
    %v27 = vshrl.u32 %v26, 7
    %v28 = vsub.s32 0, %v27
    %v29 = vrot.slane %v24, %v28
    %vm31 = vcmask 97280
    %v33 = vsel %vm31, %v18, 0
    %v36 = vsel %vm31, %v19, 0
    %v39 = vsel %vm31, %v20, 0
    %v42 = vsel %vm31, %v21, 0
    %vm44 = vcmask 1043456
    %v46 = vsel %vm44, %v23, 0
    %48 = vmatprep.subr.mxu0 0.0
    %49 = vmatpush1.msra.mxu0 %v22
    %50 = vmatprep.subr.mxu0 0.0
    %51 = vmatpush1.msra.mxu0 %v46
    %52 = vmatprep.subr.mxu0 0.0
    %53 = vmatpush1.msra.mxu0 0.0
    %54 = vmatprep.subr.mxu0 0.0
    %55 = vmatpush1.msra.mxu0 0.0
    %56 = vmatprep.subr.mxu0 0.0
    %57 = vmatpush1.msra.mxu0 0.0
    %58 = vmatprep.subr.mxu0 0.0
    %59 = vmatpush1.msra.mxu0 0.0
    %60 = vmatprep.subr.mxu0 0.0
    %61 = vmatpush1.msra.mxu0 0.0
    %62 = vmatprep.subr.mxu0 0.0
    %63 = vmatpush1.msra.mxu0 0.0
    %64 = vmatprep.subr.mxu0 0.0
    %65 = vmatpush1.msra.mxu0 0.0
    %66 = vmatprep.subr.mxu0 0.0
    %67 = vmatpush1.msra.mxu0 0.0
    %68 = vmatprep.subr.mxu0 0.0
    %69 = vmatpush1.msra.mxu0 0.0
    %70 = vmatprep.subr.mxu0 0.0
    %71 = vmatpush1.msra.mxu0 0.0
    %72 = vmatprep.subr.mxu0 0.0
    %73 = vmatpush1.msra.mxu0 0.0
    %74 = vmatprep.subr.mxu0 0.0
    %75 = vmatpush1.msra.mxu0 0.0
    %76 = vmatprep.subr.mxu0 0.0
    %77 = vmatpush1.msra.mxu0 0.0
    %78 = vmatprep.subr.mxu0 0.0
    %79 = vmatpush1.msra.mxu0 0.0
    %80 = vmatprep.subr.mxu0 0.0
    %81 = vmatpush1.msra.mxu0 0.0
    %82 = vmatprep.subr.mxu0 0.0
    %83 = vmatpush1.msra.mxu0 0.0
    %84 = vmatprep.subr.mxu0 0.0
    %85 = vmatpush1.msra.mxu0 0.0
    %86 = vmatprep.subr.mxu0 0.0
    %87 = vmatpush1.msra.mxu0 0.0
    %88 = vmatprep.subr.mxu0 0.0
    %89 = vmatpush1.msra.mxu0 0.0
    %90 = vmatprep.subr.mxu0 0.0
    %91 = vmatpush1.msra.mxu0 0.0
    %92 = vmatprep.subr.mxu0 0.0
    %93 = vmatpush1.msra.mxu0 0.0
    %94 = vmatprep.subr.mxu0 0.0
    %95 = vmatpush1.msra.mxu0 0.0
    %96 = vmatprep.subr.mxu0 0.0
    %97 = vmatpush1.msra.mxu0 0.0
    %98 = vmatprep.subr.mxu0 0.0
    %99 = vmatpush1.msra.mxu0 0.0
    %100 = vmatprep.subr.mxu0 0.0
    %101 = vmatpush1.msra.mxu0 0.0
    %102 = vmatprep.subr.mxu0 0.0
    %103 = vmatpush1.msra.mxu0 0.0
    %104 = vmatprep.subr.mxu0 0.0
    %105 = vmatpush1.msra.mxu0 0.0
    %106 = vmatprep.subr.mxu0 0.0
    %107 = vmatpush1.msra.mxu0 0.0
    %108 = vmatprep.subr.mxu0 0.0
    %109 = vmatpush1.msra.mxu0 0.0
    %110 = vmatprep.subr.mxu0 0.0
    %111 = vmatpush1.msra.mxu0 0.0
    %112 = vmatprep.mubr.f32.mxu0 0.0
    %113 = vmatmul.mubr.f32.gmra.mrb[0].mxu0 %v33
    %v114 = vpop.f32.mrb[0].mxu0
    %v115 = vadd.f32 %v29, %v114
    %v116 = vpop.f32.mrb[0].mxu0
    %117 = vmatprep.mubr.f32.mxu0 0.0
    %118 = vmatmul.mubr.f32.gmra.mrb[0].mxu0 %v36
    %v119 = vpop.f32.mrb[0].mxu0
    %v120 = vadd.f32 %v29, %v119
    %v121 = vpop.f32.mrb[0].mxu0
    %122 = vmatprep.mubr.f32.mxu0 0.0
    %123 = vmatmul.mubr.f32.gmra.mrb[0].mxu0 %v39
    %v124 = vpop.f32.mrb[0].mxu0
    %v125 = vadd.f32 %v29, %v124
    %v126 = vpop.f32.mrb[0].mxu0
    %127 = vmatprep.mubr.f32.mxu0 0.0
    %128 = vmatmul.mubr.f32.gmra.mrb[0].mxu0 %v42
    %v129 = vpop.f32.mrb[0].mxu0
    %v130 = vadd.f32 %v29, %v129
    %v131 = vpop.f32.mrb[0].mxu0
    %132 = vdwg.mxu0
    %v133 = vtanh.pop %v115
    %v134 = vtanh.pop %v120
    %v135 = vtanh.pop %v125
    %v136 = vtanh.pop %v130
    %v137 = vld [vmem:[%s3] sm:$0x1]
    %v139 = vlaneseq
    %v140 = vshrl.u32 %v139, 7
    %v141 = vsub.s32 0, %v140
    %v142 = vrot.slane %v137, %v141
    %v144 = vmul.f32 %v133, %v142
    %v145 = vmul.f32 %v134, %v142
    %v146 = vmul.f32 %v135, %v142
    %v147 = vmul.f32 %v136, %v142
    %vm148 = vcmask 261120
    %v149 = vsel %vm148, %v144, 0.0
    %150 = vadd.xlane.f32.xlu0 %v149
    %v151 = vpop.xlane.xlu0 %150
    %v152 = vsel %vm148, %v145, 0.0
    %153 = vadd.xlane.f32.xlu0 %v152
    %v154 = vpop.xlane.xlu0 %153
    %v155 = vsel %vm148, %v146, 0.0
    %156 = vadd.xlane.f32.xlu0 %v155
    %v157 = vpop.xlane.xlu0 %156
    %v158 = vsel %vm148, %v147, 0.0
    %159 = vadd.xlane.f32.xlu0 %v158
    %v160 = vpop.xlane.xlu0 %159
    %v165 = vlaneseq
    %v166 = vand.u32 %v165, 127
    %v167 = vlaneseq
    %v168 = vshrl.u32 %v167, 7
    %v169 = vsub.s32 %v166, %v168
    %v170 = vrot.slane %v151, %v169
    %v171 = vadd.s32 %v166, 4294967288
    %v172 = vlaneseq
    %v173 = vshrl.u32 %v172, 7
    %v174 = vsub.s32 %v171, %v173
    %v175 = vrot.slane %v154, %v174
    %vm176 = vcmask 130112
    %v177 = vsel %vm176, %v175, %v170
    %v178 = vadd.s32 %v166, 4294967280
    %v179 = vlaneseq
    %v180 = vshrl.u32 %v179, 7
    %v181 = vsub.s32 %v178, %v180
    %v182 = vrot.slane %v157, %v181
    %vm183 = vcmask 195712
    %v184 = vsel %vm183, %v182, %v177
    %v185 = vadd.s32 %v166, 4294967272
    %v186 = vlaneseq
    %v187 = vshrl.u32 %v186, 7
    %v188 = vsub.s32 %v185, %v187
    %v189 = vrot.slane %v160, %v188
    %vm190 = vcmask 261312
    %v191 = vsel %vm190, %v189, %v184
    %vm193 = vcmask 253952
    %194 = vst.msk [vmem:[#allocation2] sm:$0x1] %vm193, %v191
    // Predicated region
    $region18: #{tpu_custom_call.1} parent=1 // pred_check
      _
    $region19: #{tpu_custom_call.1} parent=1 // pred_check_branch
      %196 = sbr.rel (0) target = $region21
    $region20: #{tpu_custom_call.1} parent=1 // pred_region
      %s198 = ssub.s32 16, 16
      %199 = vsyncadd [#allocation3], %s198
      %s201 = sshll.u32 [#allocation2], 4
      %s202 = int_to_ptr.vmem [resolvable:$true] %s201
      %204 = dma.vmem_to_hbm [thread:$0]  %s202, 16, %s4, [#allocation3]
    $region21: #{tpu_custom_call.1} parent=1 // pred_fallthru
      _
    // Predicated region
    $region22: #{tpu_custom_call.1} parent=1 // pred_check
      _
    $region23: #{tpu_custom_call.1} parent=1 // pred_check_branch
      %206 = sbr.rel (0) target = $region25
    $region24: #{tpu_custom_call.1} parent=1 // pred_region
      %207 = dma.done [#allocation3], 16
    $region25: #{tpu_custom_call.1} parent=1 // pred_fallthru
      _
    %208 = vsyncpa [#allocation3], 1

</llo_original>
